<compile_context>
chip_gen: v6e
topology: v6e:2x2x1
jax: 0.10.0
libtpu: 0.0.40
codegen_flags: <defaults>
</compile_context>

<pallas_src>
import functools
import math

import jax
import jax.numpy as jnp
from jax.experimental import pallas as pl
from jax.experimental.pallas import tpu as pltpu


LEAKY_SLOPE = 0.2
MASK_VALUE = -9e15


def _round_up(x, m):
    return ((x + m - 1) // m) * m


def _tile_rows(n, block_rows):
    """Row tile (multiple of 32 for int8 sublane packing) and padded node count."""
    tr = _round_up(min(block_rows, n), 32)
    n_pad = _round_up(n, tr)
    return tr, n_pad


# --------------------------------------------------------------------------------
# Kernel 1: projection.  Per row tile i:
#   Wh      = h_tile @ W                      (f32 MXU accumulate)
#   whp     = [Wh | 1]                        (ones column fuses the softmax denom
#                                              into the aggregation matmul later)
#   wh2     = Wh @ a2                         (destination-node logit column)
# --------------------------------------------------------------------------------
def gat_project_kernel(h_ref, w_ref, a2_ref, whp_ref, wh2_ref):
    f_out = w_ref.shape[1]
    wh = jnp.dot(h_ref[...], w_ref[...], preferred_element_type=jnp.float32)
    whp_ref[:, :f_out] = wh
    whp_ref[:, f_out:] = jnp.ones((whp_ref.shape[0], 1), jnp.float32)
    wh2_ref[...] = jnp.dot(wh, a2_ref[...], preferred_element_type=jnp.float32)


# --------------------------------------------------------------------------------
# Kernel 2: attention.  Per row tile i (adjacency mask streamed, Wh resident):
#   e = LeakyReLU(Wh1_tile + Wh2_row); mask; stable softmax; aggregate; ELU.
# --------------------------------------------------------------------------------
def gat_attention_kernel(whp_full_ref, whp_tile_ref, wh2_row_ref, a1_ref, adj_ref,
                         out_ref, *, exp_dtype):
    f_out = out_ref.shape[1]

    # source-node logit for this row tile: Wh1 = Wh_tile @ a1  -> (TR, 1)
    wh_tile = whp_tile_ref[...]
    wh1 = jnp.dot(wh_tile[:, :f_out], a1_ref[...],
                  preferred_element_type=jnp.float32)

    # e[i, j] = Wh1[i] + Wh2[j], LeakyReLU(0.2)
    e = wh1 + wh2_row_ref[...]                                  # (TR, N_pad)
    e = jnp.where(e > 0, e, LEAKY_SLOPE * e)

    # adjacency mask (int8 stream) + numerically stable softmax weights
    att = jnp.where(adj_ref[...] != 0, e, MASK_VALUE)
    m = jnp.max(att, axis=-1, keepdims=True)
    # exp_dtype=bf16 on v6e/v7x (bf16 EUP); use f32 on v5e.  p is bf16 for the MXU.
    p = jnp.exp((att - m).astype(exp_dtype)).astype(jnp.bfloat16)

    # one MXU push gives both the numerator and the row-sum (ones column of whp)
    whp_bf = whp_full_ref[...].astype(jnp.bfloat16)             # (N_pad, f_out+1)
    acc = jnp.dot(p, whp_bf, preferred_element_type=jnp.float32)  # (TR, f_out+1)
    h_prime = acc[:, :f_out] * pl.reciprocal(acc[:, f_out:], approx=True)

    # concat=True branch of the module -> ELU
    out_ref[...] = jnp.where(h_prime > 0, h_prime, jnp.exp(h_prime) - 1.0)


# --------------------------------------------------------------------------------
# Wrappers
# --------------------------------------------------------------------------------
def preprocess_adjacency(adj, *, block_rows=512):
    """Pad + binarize the adjacency ONCE per graph (int8 0/1 mask, padded to N_pad).

    Hoisted out of the per-call path: reuse the result across forward calls /
    layers that share the same graph and block_rows.
    """
    n = adj.shape[0]
    _, n_pad = _tile_rows(n, block_rows)
    mask = (adj > 0).astype(jnp.int8)
    if n_pad != n:
        mask = jnp.pad(mask, ((0, n_pad - n), (0, n_pad - n)))
    return mask


def gat_layer_premasked(h, adj_mask, W, a, *, block_rows=512,
                        exp_dtype=jnp.bfloat16):
    """Pallas GAT layer forward (inference, is_concat=True).

    `adj_mask` must come from `preprocess_adjacency(adj, block_rows=block_rows)`.
    Use exp_dtype=jnp.float32 on v5e (no bf16 EUP there).
    """
    n, f_in = h.shape
    f_out = W.shape[1]
    tr, n_pad = _tile_rows(n, block_rows)
    assert adj_mask.shape == (n_pad, n_pad), "adj_mask must be preprocessed/padded"
    assert adj_mask.dtype == jnp.int8

    if n_pad != n:
        h = jnp.pad(h, ((0, n_pad - n), (0, 0)))
    a1 = a[:f_out, :]          # (f_out, 1)
    a2 = a[f_out:, :]          # (f_out, 1)

    grid = (n_pad // tr,)

    # --- kernel 1: projection (Wh with fused ones column + Wh2 logit column) ----
    whp, wh2 = pl.pallas_call(
        gat_project_kernel,
        out_shape=(
            jax.ShapeDtypeStruct((n_pad, f_out + 1), jnp.float32),
            jax.ShapeDtypeStruct((n_pad, 1), jnp.float32),
        ),
        grid=grid,
        in_specs=[
            pl.BlockSpec((tr, f_in), lambda i: (i, 0)),
            pl.BlockSpec((f_in, f_out), lambda i: (0, 0)),
            pl.BlockSpec((f_out, 1), lambda i: (0, 0)),
        ],
        out_specs=(
            pl.BlockSpec((tr, f_out + 1), lambda i: (i, 0)),
            pl.BlockSpec((tr, 1), lambda i: (i, 0)),
        ),
        compiler_params=pltpu.CompilerParams(dimension_semantics=("parallel",)),
    )(h, W, a2)

    # the ONLY XLA glue left: tiny (N_pad,1) -> (1,N_pad) relayout of Wh2
    wh2_row = wh2.reshape(1, n_pad)

    # VMEM budget for the bigger row tiles (keeps double-buffering on v7x's 64 MiB,
    # and overrides v5e's 16 MiB scoped default).  Lower block_rows if this clamps.
    tile_elems = tr * n_pad
    vmem_est = int(
        2 * tile_elems * 1                      # int8 adjacency, double-buffered
        + 4 * tile_elems * 4                    # f32 logit intermediates (headroom)
        + 2 * tile_elems * 2                    # bf16 softmax weights
        + 4 * n_pad * (f_out + 1) * 4           # resident Wh (+ row-tile copy)
        + 8 * tr * (f_out + 1) * 4              # acc / out / wh1
    ) + (2 << 20)
    vmem_limit = min(max(vmem_est, 32 << 20), 64 << 20)

    # --- kernel 2: attention / softmax / aggregation, adjacency streamed --------
    out = pl.pallas_call(
        functools.partial(gat_attention_kernel, exp_dtype=exp_dtype),
        out_shape=jax.ShapeDtypeStruct((n_pad, f_out), jnp.float32),
        grid=grid,
        in_specs=[
            pl.BlockSpec((n_pad, f_out + 1), lambda i: (0, 0)),  # Wh, VMEM-resident
            pl.BlockSpec((tr, f_out + 1), lambda i: (i, 0)),     # Wh row tile
            pl.BlockSpec((1, n_pad), lambda i: (0, 0)),          # Wh2 row, resident
            pl.BlockSpec((f_out, 1), lambda i: (0, 0)),          # a1, resident
            pl.BlockSpec((tr, n_pad), lambda i: (i, 0)),         # int8 adj stream
        ],
        out_specs=pl.BlockSpec((tr, f_out), lambda i: (i, 0)),
        compiler_params=pltpu.CompilerParams(
            dimension_semantics=("parallel",),
            vmem_limit_bytes=vmem_limit),
    )(whp, whp, wh2_row, a1, adj_mask)

    return out[:n]


def gat_layer(h, adj, W, a, *, block_rows=512, exp_dtype=jnp.bfloat16):
    """Convenience wrapper taking the raw adjacency (prefer precomputing the mask)."""
    adj_mask = preprocess_adjacency(adj, block_rows=block_rows)
    return gat_layer_premasked(h, adj_mask, W, a, block_rows=block_rows,
                               exp_dtype=exp_dtype)


# --------------------------------------------------------------------------------
# Reference + demo
# --------------------------------------------------------------------------------
def xavier_uniform(key, shape, gain):
    fan_in, fan_out = shape[0], shape[1]
    limit = gain * math.sqrt(6.0 / (fan_in + fan_out))
    return jax.random.uniform(key, shape, jnp.float32, -limit, limit)


def reference_gat(h, adj, W, a):
    f_out = W.shape[1]
    Wh = h @ W
    Wh1 = Wh @ a[:f_out, :]
    Wh2 = Wh @ a[f_out:, :]
    e = Wh1 + Wh2.T
    e = jnp.where(e > 0, e, LEAKY_SLOPE * e)
    att = jnp.where(adj > 0, e, MASK_VALUE)
    att = jax.nn.softmax(att, axis=-1)
    h_prime = att @ Wh
    return jnp.where(h_prime > 0, h_prime, jnp.exp(h_prime) - 1.0)


if __name__ == "__main__":
    key = jax.random.PRNGKey(0)
    k_w, k_a, k_h, k_adj = jax.random.split(key, 4)

    N = 60            # non-multiple of the tile -> exercises padding
    in_features = 32
    out_features = 16

    # deterministic parameter init matching nn.init.xavier_uniform_(gain=1.414)
    W = xavier_uniform(k_w, (in_features, out_features), gain=1.414)
    a = xavier_uniform(k_a, (2 * out_features, 1), gain=1.414)

    h = jax.random.normal(k_h, (N, in_features), jnp.float32)
    # random adjacency with self loops
    adj_rand = jax.random.uniform(k_adj, (N, N), jnp.float32)
    adj = (adj_rand > 0.7).astype(jnp.float32)
    adj = jnp.maximum(adj, jnp.eye(N, dtype=jnp.float32))

    block_rows = 32   # small tile so the toy case actually exercises the grid

    # adjacency preprocessing hoisted out of the per-call path (once per graph)
    adj_mask = preprocess_adjacency(adj, block_rows=block_rows)
    fwd = jax.jit(functools.partial(gat_layer_premasked, block_rows=block_rows))

    out = jax.block_until_ready(fwd(h, adj_mask, W, a))

    ref = reference_gat(h, adj, W, a)
    assert out.shape == (N, out_features)
    # bf16 exp / bf16 matmul operands (f32 accumulation) -> tolerance loosened vs f32
    err = float(jnp.max(jnp.abs(out - ref)))
    assert jnp.allclose(out, ref, atol=2e-2, rtol=2e-2), f"max abs err {err}"

    print("KERNEL_OK")
</pallas_src>

<mosaic_0001>
module attributes {stable_mosaic.version = 11 : i64} {
  func.func @gat_attention_kernel(%arg0: i32, %arg1: memref<64x17xf32, #tpu.memory_space<vmem>>, %arg2: memref<32x17xf32, #tpu.memory_space<vmem>>, %arg3: memref<1x64xf32, #tpu.memory_space<vmem>>, %arg4: memref<16x1xf32, #tpu.memory_space<vmem>>, %arg5: memref<32x64xi8, #tpu.memory_space<vmem>>, %arg6: memref<32x16xf32, #tpu.memory_space<vmem>>) attributes {dimension_semantics = [#tpu.dimension_semantics<parallel>], iteration_bounds = array<i64: 2>, scalar_prefetch = 0 : i64, scratch_operands = 0 : i64, tpu.core_type = #tpu.core_type<tc>, window_params = [{pipeline_mode = #tpu.pipeline_mode<synchronous>, transform_indices = @transform_0, window_bounds = array<i64: 64, 17>}, {transform_indices = @transform_1, window_bounds = array<i64: 32, 17>}, {pipeline_mode = #tpu.pipeline_mode<synchronous>, transform_indices = @transform_2, window_bounds = array<i64: 1, 64>}, {pipeline_mode = #tpu.pipeline_mode<synchronous>, transform_indices = @transform_3, window_bounds = array<i64: 16, 1>}, {transform_indices = @transform_4, window_bounds = array<i64: 32, 64>}, {transform_indices = @transform_5, window_bounds = array<i64: 32, 16>}]} {
    %c0 = arith.constant 0 : index
    %c0_0 = arith.constant 0 : index
    %0 = vector.load %arg2[%c0, %c0_0] : memref<32x17xf32, #tpu.memory_space<vmem>>, vector<32x17xf32>
    %1 = vector.extract_strided_slice %0 {offsets = [0, 0], sizes = [32, 16], strides = [1, 1]} : vector<32x17xf32> to vector<32x16xf32>
    %c0_1 = arith.constant 0 : index
    %c0_2 = arith.constant 0 : index
    %2 = vector.load %arg4[%c0_1, %c0_2] : memref<16x1xf32, #tpu.memory_space<vmem>>, vector<16x1xf32>
    %cst = arith.constant dense<0.000000e+00> : vector<32x1xf32>
    %3 = tpu.matmul %1, %2, %cst {dimension_numbers = #tpu.dot_dimension_numbers<[1], [0], [0], [1], [0, 0, 1, 1], [], []>} : vector<32x16xf32>, vector<16x1xf32>, vector<32x1xf32> -> vector<32x1xf32>
    %c0_3 = arith.constant 0 : index
    %c0_4 = arith.constant 0 : index
    %4 = vector.load %arg3[%c0_3, %c0_4] : memref<1x64xf32, #tpu.memory_space<vmem>>, vector<1x64xf32>
    %5 = vector.broadcast %3 : vector<32x1xf32> to vector<32x64xf32>
    %6 = vector.broadcast %4 : vector<1x64xf32> to vector<32x64xf32>
    %7 = arith.addf %5, %6 : vector<32x64xf32>
    %cst_5 = arith.constant 0.000000e+00 : f32
    %8 = vector.broadcast %cst_5 : f32 to vector<32x64xf32>
    %9 = arith.cmpf ogt, %7, %8 : vector<32x64xf32>
    %cst_6 = arith.constant 2.000000e-01 : f32
    %10 = vector.broadcast %cst_6 : f32 to vector<32x64xf32>
    %11 = arith.mulf %10, %7 : vector<32x64xf32>
    %12 = arith.select %9, %7, %11 : vector<32x64xi1>, vector<32x64xf32>
    %c0_7 = arith.constant 0 : index
    %c0_8 = arith.constant 0 : index
    %13 = vector.load %arg5[%c0_7, %c0_8] : memref<32x64xi8, #tpu.memory_space<vmem>>, vector<32x64xi8>
    %c0_i8 = arith.constant 0 : i8
    %14 = vector.broadcast %c0_i8 : i8 to vector<32x64xi8>
    %15 = arith.cmpi ne, %13, %14 : vector<32x64xi8>
    %cst_9 = arith.constant -9.000000e+15 : f32
    %16 = vector.broadcast %cst_9 : f32 to vector<32x64xf32>
    %17 = arith.select %15, %12, %16 : vector<32x64xi1>, vector<32x64xf32>
    %cst_10 = arith.constant dense<0xFF800000> : vector<32xf32>
    %18 = vector.multi_reduction <maximumf>, %17, %cst_10 [1] : vector<32x64xf32> to vector<32xf32>
    %19 = vector.shape_cast %18 : vector<32xf32> to vector<32x1xf32>
    %20 = vector.broadcast %19 : vector<32x1xf32> to vector<32x64xf32>
    %21 = arith.subf %17, %20 : vector<32x64xf32>
    %22 = arith.truncf %21 : vector<32x64xf32> to vector<32x64xbf16>
    %23 = math.exp %22 : vector<32x64xbf16>
    %c0_11 = arith.constant 0 : index
    %c0_12 = arith.constant 0 : index
    %24 = vector.load %arg1[%c0_11, %c0_12] : memref<64x17xf32, #tpu.memory_space<vmem>>, vector<64x17xf32>
    %25 = arith.truncf %24 : vector<64x17xf32> to vector<64x17xbf16>
    %cst_13 = arith.constant dense<0.000000e+00> : vector<32x17xf32>
    %26 = tpu.matmul %23, %25, %cst_13 {dimension_numbers = #tpu.dot_dimension_numbers<[1], [0], [0], [1], [0, 0, 1, 1], [], []>} : vector<32x64xbf16>, vector<64x17xbf16>, vector<32x17xf32> -> vector<32x17xf32>
    %27 = vector.extract_strided_slice %26 {offsets = [0, 0], sizes = [32, 16], strides = [1, 1]} : vector<32x17xf32> to vector<32x16xf32>
    %28 = vector.extract_strided_slice %26 {offsets = [0, 16], sizes = [32, 1], strides = [1, 1]} : vector<32x17xf32> to vector<32x1xf32>
    %29 = tpu.reciprocal %28 {approx = true} : vector<32x1xf32> -> vector<32x1xf32>
    %30 = vector.broadcast %29 : vector<32x1xf32> to vector<32x16xf32>
    %31 = arith.mulf %27, %30 : vector<32x16xf32>
    %cst_14 = arith.constant 0.000000e+00 : f32
    %32 = vector.broadcast %cst_14 : f32 to vector<32x16xf32>
    %33 = arith.cmpf ogt, %31, %32 : vector<32x16xf32>
    %34 = math.exp %31 : vector<32x16xf32>
    %cst_15 = arith.constant 1.000000e+00 : f32
    %35 = vector.broadcast %cst_15 : f32 to vector<32x16xf32>
    %36 = arith.subf %34, %35 : vector<32x16xf32>
    %37 = arith.select %33, %31, %36 : vector<32x16xi1>, vector<32x16xf32>
    %c0_16 = arith.constant 0 : index
    %c0_17 = arith.constant 0 : index
    %38 = vector.load %arg6[%c0_16, %c0_17] : memref<32x16xf32, #tpu.memory_space<vmem>>, vector<32x16xf32>
    tpu.vector_store %arg6[%c0_16, %c0_17], %37 {strides = array<i32>} : memref<32x16xf32, #tpu.memory_space<vmem>>, vector<32x16xf32>,
    return
  }
  func.func @transform_0(%arg0: i32) -> (i32, i32) {
    %c0_i32 = arith.constant 0 : i32
    %c0_i32_0 = arith.constant 0 : i32
    %c0_i32_1 = arith.constant 0 : i32
    return %c0_i32, %c0_i32_0 : i32, i32
  }
  func.func @transform_1(%arg0: i32) -> (i32, i32) {
    %c0_i32 = arith.constant 0 : i32
    %c0_i32_0 = arith.constant 0 : i32
    return %arg0, %c0_i32 : i32, i32
  }
  func.func @transform_2(%arg0: i32) -> (i32, i32) {
    %c0_i32 = arith.constant 0 : i32
    %c0_i32_0 = arith.constant 0 : i32
    %c0_i32_1 = arith.constant 0 : i32
    return %c0_i32, %c0_i32_0 : i32, i32
  }
  func.func @transform_3(%arg0: i32) -> (i32, i32) {
    %c0_i32 = arith.constant 0 : i32
    %c0_i32_0 = arith.constant 0 : i32
    %c0_i32_1 = arith.constant 0 : i32
    return %c0_i32, %c0_i32_0 : i32, i32
  }
  func.func @transform_4(%arg0: i32) -> (i32, i32) {
    %c0_i32 = arith.constant 0 : i32
    %c0_i32_0 = arith.constant 0 : i32
    return %arg0, %c0_i32 : i32, i32
  }
  func.func @transform_5(%arg0: i32) -> (i32, i32) {
    %c0_i32 = arith.constant 0 : i32
    %c0_i32_0 = arith.constant 0 : i32
    return %arg0, %c0_i32 : i32, i32
  }
}

module attributes {stable_mosaic.version = 11 : i64} {
  func.func @gat_project_kernel(%arg0: i32, %arg1: memref<32x32xf32, #tpu.memory_space<vmem>>, %arg2: memref<32x16xf32, #tpu.memory_space<vmem>>, %arg3: memref<16x1xf32, #tpu.memory_space<vmem>>, %arg4: memref<32x17xf32, #tpu.memory_space<vmem>>, %arg5: memref<32x1xf32, #tpu.memory_space<vmem>>) attributes {dimension_semantics = [#tpu.dimension_semantics<parallel>], iteration_bounds = array<i64: 2>, scalar_prefetch = 0 : i64, scratch_operands = 0 : i64, tpu.core_type = #tpu.core_type<tc>, window_params = [{transform_indices = @transform_0, window_bounds = array<i64: 32, 32>}, {pipeline_mode = #tpu.pipeline_mode<synchronous>, transform_indices = @transform_1, window_bounds = array<i64: 32, 16>}, {pipeline_mode = #tpu.pipeline_mode<synchronous>, transform_indices = @transform_2, window_bounds = array<i64: 16, 1>}, {transform_indices = @transform_3, window_bounds = array<i64: 32, 17>}, {transform_indices = @transform_4, window_bounds = array<i64: 32, 1>}]} {
    %c0 = arith.constant 0 : index
    %c0_0 = arith.constant 0 : index
    %0 = vector.load %arg1[%c0, %c0_0] : memref<32x32xf32, #tpu.memory_space<vmem>>, vector<32x32xf32>
    %c0_1 = arith.constant 0 : index
    %c0_2 = arith.constant 0 : index
    %1 = vector.load %arg2[%c0_1, %c0_2] : memref<32x16xf32, #tpu.memory_space<vmem>>, vector<32x16xf32>
    %cst = arith.constant dense<0.000000e+00> : vector<32x16xf32>
    %2 = tpu.matmul %0, %1, %cst {dimension_numbers = #tpu.dot_dimension_numbers<[1], [0], [0], [1], [0, 0, 1, 1], [], []>} : vector<32x32xf32>, vector<32x16xf32>, vector<32x16xf32> -> vector<32x16xf32>
    %c0_3 = arith.constant 0 : index
    %c0_4 = arith.constant 0 : index
    %3 = vector.load %arg4[%c0_3, %c0_4] : memref<32x17xf32, #tpu.memory_space<vmem>>, vector<32x16xf32>
    tpu.vector_store %arg4[%c0_3, %c0_4], %2 {strides = array<i32>} : memref<32x17xf32, #tpu.memory_space<vmem>>, vector<32x16xf32>,
    %cst_5 = arith.constant 1.000000e+00 : f32
    %4 = vector.broadcast %cst_5 : f32 to vector<32x1xf32>
    %c0_6 = arith.constant 0 : index
    %c16 = arith.constant 16 : index
    %5 = vector.load %arg4[%c0_6, %c16] : memref<32x17xf32, #tpu.memory_space<vmem>>, vector<32x1xf32>
    tpu.vector_store %arg4[%c0_6, %c16], %4 {strides = array<i32>} : memref<32x17xf32, #tpu.memory_space<vmem>>, vector<32x1xf32>,
    %c0_7 = arith.constant 0 : index
    %c0_8 = arith.constant 0 : index
    %6 = vector.load %arg3[%c0_7, %c0_8] : memref<16x1xf32, #tpu.memory_space<vmem>>, vector<16x1xf32>
    %cst_9 = arith.constant dense<0.000000e+00> : vector<32x1xf32>
    %7 = tpu.matmul %2, %6, %cst_9 {dimension_numbers = #tpu.dot_dimension_numbers<[1], [0], [0], [1], [0, 0, 1, 1], [], []>} : vector<32x16xf32>, vector<16x1xf32>, vector<32x1xf32> -> vector<32x1xf32>
    %c0_10 = arith.constant 0 : index
    %c0_11 = arith.constant 0 : index
    %8 = vector.load %arg5[%c0_10, %c0_11] : memref<32x1xf32, #tpu.memory_space<vmem>>, vector<32x1xf32>
    tpu.vector_store %arg5[%c0_10, %c0_11], %7 {strides = array<i32>} : memref<32x1xf32, #tpu.memory_space<vmem>>, vector<32x1xf32>,
    return
  }
  func.func @transform_0(%arg0: i32) -> (i32, i32) {
    %c0_i32 = arith.constant 0 : i32
    %c0_i32_0 = arith.constant 0 : i32
    return %arg0, %c0_i32 : i32, i32
  }
  func.func @transform_1(%arg0: i32) -> (i32, i32) {
    %c0_i32 = arith.constant 0 : i32
    %c0_i32_0 = arith.constant 0 : i32
    %c0_i32_1 = arith.constant 0 : i32
    return %c0_i32, %c0_i32_0 : i32, i32
  }
  func.func @transform_2(%arg0: i32) -> (i32, i32) {
    %c0_i32 = arith.constant 0 : i32
    %c0_i32_0 = arith.constant 0 : i32
    %c0_i32_1 = arith.constant 0 : i32
    return %c0_i32, %c0_i32_0 : i32, i32
  }
  func.func @transform_3(%arg0: i32) -> (i32, i32) {
    %c0_i32 = arith.constant 0 : i32
    %c0_i32_0 = arith.constant 0 : i32
    return %arg0, %c0_i32 : i32, i32
  }
  func.func @transform_4(%arg0: i32) -> (i32, i32) {
    %c0_i32 = arith.constant 0 : i32
    %c0_i32_0 = arith.constant 0 : i32
    return %arg0, %c0_i32 : i32, i32
  }
}

</mosaic_0001>

<llo_original>
// kernel: gat_layer_premasked.3
$region0: #{gat_layer_premasked.3}
  #allocation0 [shape = 'u32[]', space=smem, size = 0x4, offset = 0x4, fixed_abs, tag = 'smem constant byte address 0x4 - core index']
  #allocation1 [shape = 'u32[144,128]{1,0:T(1,128)}', space=vmem, size = 0x12000, scoped, tag = 'internal scratch']
  %s0 = inlined_call_operand.vmem [shape: f32[64,17], index: 0, kind: input, shape index: {}, may-alias: {0,1}]
  %s1 = inlined_call_operand.vmem [shape: f32[64,17], index: 1, kind: input, shape index: {}, may-alias: {0,1}]
  %s2 = inlined_call_operand.vmem [shape: f32[1,64], index: 2, kind: input, shape index: {}]
  %s3 = inlined_call_operand.vmem [shape: f32[16,1], index: 3, kind: input, shape index: {}]
  %s4 = inlined_call_operand.vmem [shape: s8[64,64], index: 4, kind: input, shape index: {}]
  %s5 = inlined_call_operand.vmem [shape: f32[64,16], index: 5, kind: output, shape index: {}]
  %s6 = sld [smem:[#allocation0]]
  $region53: #{gat_layer_premasked.3} parent=0
    _
  %s8 = ssub.s32 1, %s6
  %s9 = scalar_select 0, %s8, %s6
  loop: start=0, step=1, limit=4
  $region2: #{gat_layer_premasked.3} parent=0 // loop_pre_header
    _
  $region3: #{gat_layer_premasked.3} parent=0 // loop_header
    %s11 = sphi 0, %s15
    %p12 = scmp.ge.s32.totalorder %s11, 4
    %s19 = sphi 0, %s19
    %s21 = sphi 0, %s19
    %s22 = sphi 0, %s21
    %s36 = sphi 0, %s22
    %s42 = sphi 0, %s44
    %s45 = sphi 0, %s42
    %s46 = sphi 0, %s45
    %s62 = sphi 0, %s46
    %s66 = sphi 0, %s66
    %s68 = sphi 0, %s66
    %s69 = sphi 0, %s68
    %s83 = sphi 0, %s69
    %s87 = sphi 0, %s87
    %s89 = sphi 0, %s87
    %s90 = sphi 0, %s89
    %s104 = sphi 0, %s90
    %s110 = sphi 0, %s112
    %s113 = sphi 0, %s110
    %s114 = sphi 0, %s113
    %s130 = sphi 0, %s114
    %s136 = sphi 0, %s138
    %s139 = sphi 0, %s136
    %s140 = sphi 0, %s139
    %s156 = sphi 0, %s140
  $region4: #{gat_layer_premasked.3} parent=0 // loop_header_branch
    %14 = sbr.rel (%p12) target = $region8
  $region5: #{gat_layer_premasked.3} parent=0 // loop_body
    %s16 = ssub.s32 %s11, 1
    %s17 = ssub.s32 %s11, 2
    %s18 = sadd.s32 %s11, 1
    %s20 = sadd.s32 %s19, 1
    %p23 = scmp.eq.s32.totalorder %s11, 1
    %p24 = scmp.ne.s32.totalorder %s19, %s21
    %p25 = scmp.eq.s32.totalorder %s11, 0
    %p26 = por %p24, %p25
    %p27 = scmp.ne.s32.totalorder %s19, %s21
    %p28 = scmp.eq.s32.totalorder %s16, 1
    %p29 = por %p27, %p28
    %p30 = scmp.ne.s32.totalorder %s21, %s22
    %p31 = scmp.eq.s32.totalorder %s16, 0
    %p32 = por %p30, %p31
    %p33 = scmp.ne.s32.totalorder %s21, %s22
    %p34 = scmp.eq.s32.totalorder %s17, 1
    %p35 = por %p33, %p34
    %p37 = scmp.ne.s32.totalorder %s22, %s36
    %p38 = scmp.eq.s32.totalorder %s17, 0
    %p39 = por %p37, %p38
    %s40 = ssub.s32 %s11, %s18
    %p41 = scmp.eq.s32.totalorder %s40, 0
    %s43 = sadd.s32 %s42, 1
    %s44 = scalar_select %p41, %s42, %s43
    %p47 = pneg %p41
    %p48 = scmp.eq.s32.totalorder %s11, 1
    %p49 = por %p47, %p48
    %p50 = scmp.ne.s32.totalorder %s42, %s45
    %p51 = scmp.eq.s32.totalorder %s11, 0
    %p52 = por %p50, %p51
    %p53 = scmp.ne.s32.totalorder %s42, %s45
    %p54 = scmp.eq.s32.totalorder %s16, 1
    %p55 = por %p53, %p54
    %p56 = scmp.ne.s32.totalorder %s45, %s46
    %p57 = scmp.eq.s32.totalorder %s16, 0
    %p58 = por %p56, %p57
    %p59 = scmp.ne.s32.totalorder %s45, %s46
    %p60 = scmp.eq.s32.totalorder %s17, 1
    %p61 = por %p59, %p60
    %p63 = scmp.ne.s32.totalorder %s46, %s62
    %p64 = scmp.eq.s32.totalorder %s17, 0
    %p65 = por %p63, %p64
    %s67 = sadd.s32 %s66, 1
    %p70 = scmp.eq.s32.totalorder %s11, 1
    %p71 = scmp.ne.s32.totalorder %s66, %s68
    %p72 = scmp.eq.s32.totalorder %s11, 0
    %p73 = por %p71, %p72
    %p74 = scmp.ne.s32.totalorder %s66, %s68
    %p75 = scmp.eq.s32.totalorder %s16, 1
    %p76 = por %p74, %p75
    %p77 = scmp.ne.s32.totalorder %s68, %s69
    %p78 = scmp.eq.s32.totalorder %s16, 0
    %p79 = por %p77, %p78
    %p80 = scmp.ne.s32.totalorder %s68, %s69
    %p81 = scmp.eq.s32.totalorder %s17, 1
    %p82 = por %p80, %p81
    %p84 = scmp.ne.s32.totalorder %s69, %s83
    %p85 = scmp.eq.s32.totalorder %s17, 0
    %p86 = por %p84, %p85
    %s88 = sadd.s32 %s87, 1
    %p91 = scmp.eq.s32.totalorder %s11, 1
    %p92 = scmp.ne.s32.totalorder %s87, %s89
    %p93 = scmp.eq.s32.totalorder %s11, 0
    %p94 = por %p92, %p93
    %p95 = scmp.ne.s32.totalorder %s87, %s89
    %p96 = scmp.eq.s32.totalorder %s16, 1
    %p97 = por %p95, %p96
    %p98 = scmp.ne.s32.totalorder %s89, %s90
    %p99 = scmp.eq.s32.totalorder %s16, 0
    %p100 = por %p98, %p99
    %p101 = scmp.ne.s32.totalorder %s89, %s90
    %p102 = scmp.eq.s32.totalorder %s17, 1
    %p103 = por %p101, %p102
    %p105 = scmp.ne.s32.totalorder %s90, %s104
    %p106 = scmp.eq.s32.totalorder %s17, 0
    %p107 = por %p105, %p106
    %s108 = ssub.s32 %s11, %s18
    %p109 = scmp.eq.s32.totalorder %s108, 0
    %s111 = sadd.s32 %s110, 1
    %s112 = scalar_select %p109, %s110, %s111
    %p115 = pneg %p109
    %p116 = scmp.eq.s32.totalorder %s11, 1
    %p117 = por %p115, %p116
    %p118 = scmp.ne.s32.totalorder %s110, %s113
    %p119 = scmp.eq.s32.totalorder %s11, 0
    %p120 = por %p118, %p119
    %p121 = scmp.ne.s32.totalorder %s110, %s113
    %p122 = scmp.eq.s32.totalorder %s16, 1
    %p123 = por %p121, %p122
    %p124 = scmp.ne.s32.totalorder %s113, %s114
    %p125 = scmp.eq.s32.totalorder %s16, 0
    %p126 = por %p124, %p125
    %p127 = scmp.ne.s32.totalorder %s113, %s114
    %p128 = scmp.eq.s32.totalorder %s17, 1
    %p129 = por %p127, %p128
    %p131 = scmp.ne.s32.totalorder %s114, %s130
    %p132 = scmp.eq.s32.totalorder %s17, 0
    %p133 = por %p131, %p132
    %s134 = ssub.s32 %s11, %s18
    %p135 = scmp.eq.s32.totalorder %s134, 0
    %s137 = sadd.s32 %s136, 1
    %s138 = scalar_select %p135, %s136, %s137
    %p141 = pneg %p135
    %p142 = scmp.eq.s32.totalorder %s11, 1
    %p143 = por %p141, %p142
    %p144 = scmp.ne.s32.totalorder %s136, %s139
    %p145 = scmp.eq.s32.totalorder %s11, 0
    %p146 = por %p144, %p145
    %p147 = scmp.ne.s32.totalorder %s136, %s139
    %p148 = scmp.eq.s32.totalorder %s16, 1
    %p149 = por %p147, %p148
    %p150 = scmp.ne.s32.totalorder %s139, %s140
    %p151 = scmp.eq.s32.totalorder %s16, 0
    %p152 = por %p150, %p151
    %p153 = scmp.ne.s32.totalorder %s139, %s140
    %p154 = scmp.eq.s32.totalorder %s17, 1
    %p155 = por %p153, %p154
    %p157 = scmp.ne.s32.totalorder %s140, %s156
    %p158 = scmp.eq.s32.totalorder %s17, 0
    %p159 = por %p157, %p158
    %p160 = scmp.le.s32.totalorder 1, %s11
    %p161 = scmp.lt.s32.totalorder %s11, 3
    %p162 = pnand %p160, %p161
    %p163 = pneg %p162
    // Predicated region
    $region9: #{gat_layer_premasked.3} parent=5 // pred_check
      _
    $region10: #{gat_layer_premasked.3} parent=5 // pred_check_branch
      %165 = sbr.rel (%p162) target = $region12
    $region11: #{gat_layer_premasked.3} parent=5 // pred_region
      %s166 = ssub.s32 %s11, 1
      // Predicated region
      $region13: #{gat_layer_premasked.3} parent=11 // pred_check
        %p167 = pneg %p32
      $region14: #{gat_layer_premasked.3} parent=11 // pred_check_branch
        %169 = sbr.rel (%p167) target = $region16
      $region15: #{gat_layer_premasked.3} parent=11 // pred_region
        _
      $region16: #{gat_layer_premasked.3} parent=11 // pred_fallthru
        _
      // Predicated region
      $region17: #{gat_layer_premasked.3} parent=11 // pred_check
        %p170 = pneg %p79
      $region18: #{gat_layer_premasked.3} parent=11 // pred_check_branch
        %172 = sbr.rel (%p170) target = $region20
      $region19: #{gat_layer_premasked.3} parent=11 // pred_region
        _
      $region20: #{gat_layer_premasked.3} parent=11 // pred_fallthru
        _
      // Predicated region
      $region21: #{gat_layer_premasked.3} parent=11 // pred_check
        %p173 = pneg %p100
      $region22: #{gat_layer_premasked.3} parent=11 // pred_check_branch
        %175 = sbr.rel (%p173) target = $region24
      $region23: #{gat_layer_premasked.3} parent=11 // pred_region
        _
      $region24: #{gat_layer_premasked.3} parent=11 // pred_fallthru
        _
    $region12: #{gat_layer_premasked.3} parent=5 // pred_fallthru
      _
    %p176 = scmp.lt.s32.totalorder %s11, 2
    // Predicated region
    $region25: #{gat_layer_premasked.3} parent=5 // pred_check
      %p177 = pneg %p176
    $region26: #{gat_layer_premasked.3} parent=5 // pred_check_branch
      %179 = sbr.rel (%p177) target = $region28
    $region27: #{gat_layer_premasked.3} parent=5 // pred_region
      // Predicated region
      $region29: #{gat_layer_premasked.3} parent=27 // pred_check
        %p180 = pneg %p52
      $region30: #{gat_layer_premasked.3} parent=27 // pred_check_branch
        %182 = sbr.rel (%p180) target = $region32
      $region31: #{gat_layer_premasked.3} parent=27 // pred_region
        %s183 = smul.u32 4, %s11
        %p184 = scmp.lt.s32.totalorder %s183, 7
        %s185 = scalar_select %p184, %s183, 7
        %s186 = smul.addr %s185, 8
        %s187 = scalar_lea.vmem %s1, %s186
        %s188 = smul.u32 4, %s11
      $region32: #{gat_layer_premasked.3} parent=27 // pred_fallthru
        _
      // Predicated region
      $region33: #{gat_layer_premasked.3} parent=27 // pred_check
        %p189 = pneg %p120
      $region34: #{gat_layer_premasked.3} parent=27 // pred_check_branch
        %191 = sbr.rel (%p189) target = $region36
      $region35: #{gat_layer_premasked.3} parent=27 // pred_region
        %p192 = scmp.lt.s32.totalorder %s11, 1
        %s193 = scalar_select %p192, %s11, 1
        %s194 = smul.addr %s193, 8
        %s195 = scalar_lea.vmem %s4, %s194
      $region36: #{gat_layer_premasked.3} parent=27 // pred_fallthru
        _
    $region28: #{gat_layer_premasked.3} parent=5 // pred_fallthru
      _
    %p196 = scmp.le.s32.totalorder 1, %s11
    %p197 = scmp.lt.s32.totalorder %s11, 3
    %p198 = pnand %p196, %p197
    %p199 = pneg %p198
    // Predicated region
    $region37: #{gat_layer_premasked.3} parent=5 // pred_check
      _
    $region38: #{gat_layer_premasked.3} parent=5 // pred_check_branch
      %201 = sbr.rel (%p198) target = $region40
    $region39: #{gat_layer_premasked.3} parent=5 // pred_region
      %s202 = ssub.s32 %s11, 1
      %p203 = pneg %p32
      %p204 = pneg %p29
      %s205 = smul.u32 4, %s16
      %p206 = scmp.lt.s32.totalorder %s205, 7
      %s207 = scalar_select %p206, %s205, 7
      %s208 = smul.addr %s207, 8
      %s209 = scalar_lea.vmem %s1, %s208
      %p210 = pneg %p58
      %p211 = pneg %p55
      %p212 = pneg %p79
      %p213 = pneg %p76
      %p214 = pneg %p100
      %p215 = pneg %p97
      %p216 = scmp.lt.s32.totalorder %s16, 1
      %s217 = scalar_select %p216, %s16, 1
      %s218 = smul.addr %s217, 8
      %s219 = scalar_lea.vmem %s4, %s218
      %p220 = pneg %p126
      %p221 = pneg %p123
      %p222 = pneg %p152
      %p223 = pneg %p149
      %s224 = smul.u32 4, %s16
      %p225 = scmp.lt.s32.totalorder %s224, 7
      %s226 = scalar_select %p225, %s224, 7
      %s227 = smul.addr %s226, 8
      %s228 = scalar_lea.vmem %s5, %s227
      %s229 = smul.u32 4, %s16
      %p230 = scmp.lt.s32.totalorder %s229, 7
      %s231 = scalar_select %p230, %s229, 7
      %s232 = smul.addr %s231, 8
      %s233 = scalar_lea.vmem %s1, %s232
      %s234 = smul.u32 4, %s16
      %p235 = scmp.lt.s32.totalorder %s16, 1
      %s236 = scalar_select %p235, %s16, 1
      %s237 = smul.addr %s236, 8
      %s238 = scalar_lea.vmem %s4, %s237
      %s239 = smul.u32 4, %s16
      %p240 = scmp.lt.s32.totalorder %s239, 7
      %s241 = scalar_select %p240, %s239, 7
      %s242 = smul.addr %s241, 8
      %s243 = scalar_lea.vmem %s5, %s242
      %s244 = smul.u32 4, %s16
      %v248 = vld [vmem:[%s233] sm:$0xff]
      %v249 = vld [vmem:[%s233 + $0x8] sm:$0xff]
      %v250 = vld [vmem:[%s233 + $0x10] sm:$0xff]
      %v251 = vld [vmem:[%s233 + $0x18] sm:$0xff]
      %v252 = vld [vmem:[%s3] sm:$0xff]
      %v253 = vld [vmem:[%s3 + $0x8] sm:$0xff]
      %vm254 = vcmask 130048
      %v256 = vsel %vm254, %v248, 0
      %v259 = vsel %vm254, %v249, 0
      %v262 = vsel %vm254, %v250, 0
      %v265 = vsel %vm254, %v251, 0
      %267 = vmatprep.subr.mxu0 0.0
      %268 = vmatpush1.msra.mxu0 0.0
      %269 = vmatprep.subr.mxu0 0.0
      %270 = vmatpush1.msra.mxu0 0.0
      %271 = vmatprep.subr.mxu0 0.0
      %272 = vmatpush1.msra.mxu0 0.0
      %273 = vmatprep.subr.mxu0 0.0
      %274 = vmatpush1.msra.mxu0 0.0
      %275 = vmatprep.subr.mxu0 0.0
      %276 = vmatpush1.msra.mxu0 0.0
      %277 = vmatprep.subr.mxu0 0.0
      %278 = vmatpush1.msra.mxu0 0.0
      %279 = vmatprep.subr.mxu0 0.0
      %280 = vmatpush1.msra.mxu0 0.0
      %281 = vmatprep.subr.mxu0 0.0
      %282 = vmatpush1.msra.mxu0 0.0
      %283 = vmatprep.subr.mxu0 0.0
      %284 = vmatpush1.msra.mxu0 0.0
      %285 = vmatprep.subr.mxu0 0.0
      %286 = vmatpush1.msra.mxu0 0.0
      %287 = vmatprep.subr.mxu0 0.0
      %288 = vmatpush1.msra.mxu0 0.0
      %289 = vmatprep.subr.mxu0 0.0
      %290 = vmatpush1.msra.mxu0 0.0
      %291 = vmatprep.subr.mxu0 0.0
      %292 = vmatpush1.msra.mxu0 0.0
      %293 = vmatprep.subr.mxu0 0.0
      %294 = vmatpush1.msra.mxu0 0.0
      %295 = vmatprep.subr.mxu0 0.0
      %296 = vmatpush1.msra.mxu0 %v253
      %297 = vmatprep.subr.mxu0 0.0
      %298 = vmatpush1.msra.mxu0 %v252
      %299 = vmatprep.subr.mxu0 0.0
      %300 = vmatpush2.msra.mxu0 0.0
      %301 = vmatprep.subr.mxu0 0.0
      %302 = vmatpush2.msra.mxu0 0.0
      %303 = vmatprep.subr.mxu0 0.0
      %304 = vmatpush2.msra.mxu0 0.0
      %305 = vmatprep.subr.mxu0 0.0
      %306 = vmatpush2.msra.mxu0 0.0
      %307 = vmatprep.subr.mxu0 0.0
      %308 = vmatpush2.msra.mxu0 0.0
      %309 = vmatprep.subr.mxu0 0.0
      %310 = vmatpush2.msra.mxu0 0.0
      %311 = vmatprep.subr.mxu0 0.0
      %312 = vmatpush2.msra.mxu0 0.0
      %313 = vmatprep.subr.mxu0 0.0
      %314 = vmatpush2.msra.mxu0 0.0
      %315 = vmatprep.subr.mxu0 0.0
      %316 = vmatpush2.msra.mxu0 0.0
      %317 = vmatprep.subr.mxu0 0.0
      %318 = vmatpush2.msra.mxu0 0.0
      %319 = vmatprep.subr.mxu0 0.0
      %320 = vmatpush2.msra.mxu0 0.0
      %321 = vmatprep.subr.mxu0 0.0
      %322 = vmatpush2.msra.mxu0 0.0
      %323 = vmatprep.subr.mxu0 0.0
      %324 = vmatpush2.msra.mxu0 0.0
      %325 = vmatprep.subr.mxu0 0.0
      %326 = vmatpush2.msra.mxu0 0.0
      %327 = vmatprep.subr.mxu0 0.0
      %328 = vmatpush2.msra.mxu0 0.0
      %329 = vmatprep.subr.mxu0 0.0
      %330 = vmatpush2.msra.mxu0 0.0
      %331 = vmatprep.mubr.f32.mxu0 0.0
      %332 = vmatmul.mubr.f32.gmra.mxu0 %v256
      %v333 = vpop.f32.mrf.mxu0
      %v334 = vadd.f32 0.0, %v333
      %v335 = vpop.f32.mrf.mxu0
      %336 = vmatprep.mubr.f32.mxu0 0.0
      %337 = vmatmul.mubr.f32.gmra.mxu0 %v259
      %v338 = vpop.f32.mrf.mxu0
      %v339 = vadd.f32 0.0, %v338
      %v340 = vpop.f32.mrf.mxu0
      %341 = vmatprep.mubr.f32.mxu0 0.0
      %342 = vmatmul.mubr.f32.gmra.mxu0 %v262
      %v343 = vpop.f32.mrf.mxu0
      %v344 = vadd.f32 0.0, %v343
      %v345 = vpop.f32.mrf.mxu0
      %346 = vmatprep.mubr.f32.mxu0 0.0
      %347 = vmatmul.mubr.f32.gmra.mxu0 %v265
      %v348 = vpop.f32.mrf.mxu0
      %v349 = vadd.f32 0.0, %v348
      %v350 = vpop.f32.mrf.mxu0
      %351 = vdwg.mxu0
      %v352 = vld [vmem:[%s2] sm:$0x1]
      %354 = vset.pattern.permute.xlu0 0
      %355 = vperm.xlu0 %354, %v334
      %v356 = vpop.permute.xlu0 %355
      %359 = vset.pattern.permute.xlu0 0
      %360 = vperm.xlu0 %359, %v339
      %v361 = vpop.permute.xlu0 %360
      %364 = vset.pattern.permute.xlu0 0
      %365 = vperm.xlu0 %364, %v344
      %v366 = vpop.permute.xlu0 %365
      %369 = vset.pattern.permute.xlu0 0
      %370 = vperm.xlu0 %369, %v349
      %v371 = vpop.permute.xlu0 %370
      %v374 = vlaneseq
      %v375 = vshrl.u32 %v374, 7
      %v376 = vsub.s32 0, %v375
      %v377 = vrot.slane %v352, %v376
      %v379 = vadd.f32 %v356, %v377
      %v380 = vadd.f32 %v361, %v377
      %v381 = vadd.f32 %v366, %v377
      %v382 = vadd.f32 %v371, %v377
      %vm383 = vcmp.gt.f32.partialorder %v379, 0.0
      %vm384 = vcmp.gt.f32.partialorder %v380, 0.0
      %vm385 = vcmp.gt.f32.partialorder %v381, 0.0
      %vm386 = vcmp.gt.f32.partialorder %v382, 0.0
      %v387 = vmul.f32 %v379, 0.2
      %v388 = vmul.f32 %v380, 0.2
      %v389 = vmul.f32 %v381, 0.2
      %v390 = vmul.f32 %v382, 0.2
      %v391 = vsel %vm383, %v379, %v387
      %v392 = vsel %vm384, %v380, %v388
      %v393 = vsel %vm385, %v381, %v389
      %v394 = vsel %vm386, %v382, %v390
      %v395 = vld [vmem:[%s238] sm:$0xff]
      %vm396 = vnez %v395
      %v397 = vsel %vm396, 16843009, 0
      %v398 = vunpack.c.0.s8 %v397
      %v399 = vunpack.c.1.s8 %v397
      %v400 = vunpack.c.2.s8 %v397
      %v401 = vunpack.c.3.s8 %v397
      %v402 = vpack.c.b16 %v398, %v398
      %v403 = vpack.c.b8 %v402, %v402
      %v404 = vpack.c.b16 %v399, %v399
      %v405 = vpack.c.b8 %v404, %v404
      %v406 = vpack.c.b16 %v400, %v400
      %v407 = vpack.c.b8 %v406, %v406
      %v408 = vpack.c.b16 %v401, %v401
      %v409 = vpack.c.b8 %v408, %v408
      %vm410 = vnez %v403
      %vm411 = vnez %v405
      %vm412 = vnez %v407
      %vm413 = vnez %v409
      %v414 = vsel %vm410, 16843009, 0
      %v415 = vsel %vm411, 16843009, 0
      %v416 = vsel %vm412, 16843009, 0
      %v417 = vsel %vm413, 16843009, 0
      %v418 = vunpack.c.0.s8 %v414
      %v419 = vunpack.c.0.s8 %v415
      %v420 = vunpack.c.0.s8 %v416
      %v421 = vunpack.c.0.s8 %v417
      %vm422 = vcmp.ne.s32.totalorder %v418, 0
      %vm423 = vcmp.ne.s32.totalorder %v419, 0
      %vm424 = vcmp.ne.s32.totalorder %v420, 0
      %vm425 = vcmp.ne.s32.totalorder %v421, 0
      %v426 = vsel %vm422, %v391, -9e+15
      %v427 = vsel %vm423, %v392, -9e+15
      %v428 = vsel %vm424, %v393, -9e+15
      %v429 = vsel %vm425, %v394, -9e+15
      %vm430 = vcmask 523264
      %v431 = vsel %vm430, %v426, -inf
      %432 = vmax.xlane.f32.xlu0 %v431
      %v433 = vpop.xlane.xlu0 %432
      %v434 = vsel %vm430, %v427, -inf
      %435 = vmax.xlane.f32.xlu0 %v434
      %v436 = vpop.xlane.xlu0 %435
      %v437 = vsel %vm430, %v428, -inf
      %438 = vmax.xlane.f32.xlu0 %v437
      %v439 = vpop.xlane.xlu0 %438
      %v440 = vsel %vm430, %v429, -inf
      %441 = vmax.xlane.f32.xlu0 %v440
      %v442 = vpop.xlane.xlu0 %441
      %v443 = vsub.f32 %v426, %v433
      %v444 = vsub.f32 %v427, %v436
      %v445 = vsub.f32 %v428, %v439
      %v446 = vsub.f32 %v429, %v442
      %v447 = vpack.c.bf16 %v444, %v443
      %v448 = vpack.c.bf16 %v446, %v445
      %v450 = vmul.bf16 %v447, 1069105081
      %v451 = vpow.bf16.pop %v450
      %v453 = vmul.bf16 %v448, 1069105081
      %v454 = vpow.bf16.pop %v453
      %v455 = vld [vmem:[%s0] sm:$0xff]
      %v456 = vld [vmem:[%s0 + $0x8] sm:$0xff]
      %v457 = vld [vmem:[%s0 + $0x10] sm:$0xff]
      %v458 = vld [vmem:[%s0 + $0x18] sm:$0xff]
      %v459 = vld [vmem:[%s0 + $0x20] sm:$0xff]
      %v460 = vld [vmem:[%s0 + $0x28] sm:$0xff]
      %v461 = vld [vmem:[%s0 + $0x30] sm:$0xff]
      %v462 = vld [vmem:[%s0 + $0x38] sm:$0xff]
      %v463 = vpack.c.bf16 %v456, %v455
      %v464 = vpack.c.bf16 %v458, %v457
      %v465 = vpack.c.bf16 %v460, %v459
      %v466 = vpack.c.bf16 %v462, %v461
      %v468 = vsel %vm430, %v451, 0
      %v471 = vsel %vm430, %v454, 0
      %473 = vmatprep.subr.bf16.mxu0 0
      %474 = vmatpush1.bf16.msra.mxu0 0
      %475 = vmatprep.subr.bf16.mxu0 0
      %476 = vmatpush1.bf16.msra.mxu0 0
      %477 = vmatprep.subr.bf16.mxu0 0
      %478 = vmatpush1.bf16.msra.mxu0 0
      %479 = vmatprep.subr.bf16.mxu0 0
      %480 = vmatpush1.bf16.msra.mxu0 0
      %481 = vmatprep.subr.bf16.mxu0 0
      %482 = vmatpush1.bf16.msra.mxu0 %v466
      %483 = vmatprep.subr.bf16.mxu0 0
      %484 = vmatpush1.bf16.msra.mxu0 %v465
      %485 = vmatprep.subr.bf16.mxu0 0
      %486 = vmatpush1.bf16.msra.mxu0 %v464
      %487 = vmatprep.subr.bf16.mxu0 0
      %488 = vmatpush1.bf16.msra.mxu0 %v463
      %489 = vmatprep.subr.bf16.mxu0 0
      %490 = vmatpush2.bf16.msra.mxu0 0
      %491 = vmatprep.subr.bf16.mxu0 0
      %492 = vmatpush2.bf16.msra.mxu0 0
      %493 = vmatprep.subr.bf16.mxu0 0
      %494 = vmatpush2.bf16.msra.mxu0 0
      %495 = vmatprep.subr.bf16.mxu0 0
      %496 = vmatpush2.bf16.msra.mxu0 0
      %497 = vmatprep.subr.bf16.mxu0 0
      %498 = vmatpush2.bf16.msra.mxu0 0
      %499 = vmatprep.subr.bf16.mxu0 0
      %500 = vmatpush2.bf16.msra.mxu0 0
      %501 = vmatprep.subr.bf16.mxu0 0
      %502 = vmatpush2.bf16.msra.mxu0 0
      %503 = vmatprep.subr.bf16.mxu0 0
      %504 = vmatpush2.bf16.msra.mxu0 0
      %505 = vmatprep.mubr.bf16.mxu0 0
      %506 = vmatmul.mubr.bf16.gmra.mxu0 %v468
      %v507 = vpop.f32.mrf.mxu0
      %v508 = vadd.f32 0.0, %v507
      %v509 = vpop.f32.mrf.mxu0
      %v510 = vpop.f32.mrf.mxu0
      %v511 = vadd.f32 0.0, %v510
      %v512 = vpop.f32.mrf.mxu0
      %513 = vmatprep.mubr.bf16.mxu0 0
      %514 = vmatmul.mubr.bf16.gmra.mxu0 %v471
      %v515 = vpop.f32.mrf.mxu0
      %v516 = vadd.f32 0.0, %v515
      %v517 = vpop.f32.mrf.mxu0
      %v518 = vpop.f32.mrf.mxu0
      %v519 = vadd.f32 0.0, %v518
      %v520 = vpop.f32.mrf.mxu0
      %521 = vdwg.mxu0
      %v522 = vrcp.pop %v508
      %v523 = vrcp.pop %v511
      %v524 = vrcp.pop %v516
      %v525 = vrcp.pop %v519
      %527 = vset.pattern.permute.xlu0 16
      %528 = vperm.xlu0 %527, %v522
      %v529 = vpop.permute.xlu0 %528
      %532 = vset.pattern.permute.xlu0 16
      %533 = vperm.xlu0 %532, %v523
      %v534 = vpop.permute.xlu0 %533
      %537 = vset.pattern.permute.xlu0 16
      %538 = vperm.xlu0 %537, %v524
      %v539 = vpop.permute.xlu0 %538
      %542 = vset.pattern.permute.xlu0 16
      %543 = vperm.xlu0 %542, %v525
      %v544 = vpop.permute.xlu0 %543
      %v546 = vmul.f32 %v508, %v529
      %v547 = vmul.f32 %v511, %v534
      %v548 = vmul.f32 %v516, %v539
      %v549 = vmul.f32 %v519, %v544
      %vm550 = vcmp.gt.f32.partialorder %v546, 0.0
      %vm551 = vcmp.gt.f32.partialorder %v547, 0.0
      %vm552 = vcmp.gt.f32.partialorder %v548, 0.0
      %vm553 = vcmp.gt.f32.partialorder %v549, 0.0
      %v554 = vmul.f32 %v546, 1.442695
      %v555 = vpow.pop %v554
      %v556 = vmul.f32 %v547, 1.442695
      %v557 = vpow.pop %v556
      %v558 = vmul.f32 %v548, 1.442695
      %v559 = vpow.pop %v558
      %v560 = vmul.f32 %v549, 1.442695
      %v561 = vpow.pop %v560
      %v562 = vsub.f32 %v555, 1.0
      %v563 = vsub.f32 %v557, 1.0
      %v564 = vsub.f32 %v559, 1.0
      %v565 = vsub.f32 %v561, 1.0
      %v566 = vsel %vm550, %v546, %v562
      %v567 = vsel %vm551, %v547, %v563
      %v568 = vsel %vm552, %v548, %v564
      %v569 = vsel %vm553, %v549, %v565
      %570 = vst.msk [vmem:[%s243] sm:$0xff] %vm254, %v566
      %571 = vst.msk [vmem:[%s243 + $0x8] sm:$0xff] %vm254, %v567
      %572 = vst.msk [vmem:[%s243 + $0x10] sm:$0xff] %vm254, %v568
      %573 = vst.msk [vmem:[%s243 + $0x18] sm:$0xff] %vm254, %v569
      %s574 = smul.u32 4, %s16
      %p575 = scmp.lt.s32.totalorder %s574, 7
      %s576 = scalar_select %p575, %s574, 7
      %s577 = smul.addr %s576, 8
      %s578 = scalar_lea.vmem %s5, %s577
      // Predicated region
      $region41: #{gat_layer_premasked.3} parent=39 // pred_check
        %p579 = pneg %p149
      $region42: #{gat_layer_premasked.3} parent=39 // pred_check_branch
        %581 = sbr.rel (%p579) target = $region44
      $region43: #{gat_layer_premasked.3} parent=39 // pred_region
        %s582 = smul.u32 4, %s16
      $region44: #{gat_layer_premasked.3} parent=39 // pred_fallthru
        _
    $region40: #{gat_layer_premasked.3} parent=5 // pred_fallthru
      _
    %p583 = scmp.le.s32.totalorder 2, %s11
    // Predicated region
    $region45: #{gat_layer_premasked.3} parent=5 // pred_check
      %p584 = pneg %p583
    $region46: #{gat_layer_premasked.3} parent=5 // pred_check_branch
      %586 = sbr.rel (%p584) target = $region48
    $region47: #{gat_layer_premasked.3} parent=5 // pred_region
      %s587 = ssub.s32 %s11, 2
      // Predicated region
      $region49: #{gat_layer_premasked.3} parent=47 // pred_check
        %p588 = pneg %p155
      $region50: #{gat_layer_premasked.3} parent=47 // pred_check_branch
        %590 = sbr.rel (%p588) target = $region52
      $region51: #{gat_layer_premasked.3} parent=47 // pred_region
        %s591 = smul.u32 4, %s17
        %p592 = scmp.lt.s32.totalorder %s591, 7
        %s593 = scalar_select %p592, %s591, 7
        %s594 = smul.addr %s593, 8
        %s595 = scalar_lea.vmem %s5, %s594
      $region52: #{gat_layer_premasked.3} parent=47 // pred_fallthru
        _
    $region48: #{gat_layer_premasked.3} parent=5 // pred_fallthru
      _
  $region6: #{gat_layer_premasked.3} parent=0 // loop_footer
    %s15 = sadd.s32 1, %s11
  $region7: #{gat_layer_premasked.3} parent=0 // loop_footer_branch
    %10 = sbr.rel target = $region3
  $region8: #{gat_layer_premasked.3} parent=0 // loop_exit
    _

// kernel: gat_layer_premasked.2
$region0: #{gat_layer_premasked.2}
  #allocation0 [shape = 'u32[]', space=smem, size = 0x4, offset = 0x4, fixed_abs, tag = 'smem constant byte address 0x4 - core index']
  #allocation1 [shape = 'u32[144,128]{1,0:T(1,128)}', space=vmem, size = 0x12000, scoped, tag = 'internal scratch']
  %s0 = inlined_call_operand.vmem [shape: f32[64,32], index: 0, kind: input, shape index: {}]
  %s1 = inlined_call_operand.vmem [shape: f32[32,16], index: 1, kind: input, shape index: {}]
  %s2 = inlined_call_operand.vmem [shape: f32[16,1], index: 2, kind: input, shape index: {}]
  %s3 = inlined_call_operand.vmem [shape: f32[64,17], index: 3, kind: output, shape index: {0}]
  %s4 = inlined_call_operand.vmem [shape: f32[64,1], index: 4, kind: output, shape index: {1}]
  %5 = xla_tuple %s3, %s4
  %s6 = sld [smem:[#allocation0]]
  $region53: #{gat_layer_premasked.2} parent=0
    _
  %s8 = ssub.s32 1, %s6
  %s9 = scalar_select 0, %s8, %s6
  loop: start=0, step=1, limit=4
  $region2: #{gat_layer_premasked.2} parent=0 // loop_pre_header
    _
  $region3: #{gat_layer_premasked.2} parent=0 // loop_header
    %s11 = sphi 0, %s15
    %p12 = scmp.ge.s32.totalorder %s11, 4
    %s21 = sphi 0, %s23
    %s24 = sphi 0, %s21
    %s25 = sphi 0, %s24
    %s41 = sphi 0, %s25
    %s45 = sphi 0, %s45
    %s47 = sphi 0, %s45
    %s48 = sphi 0, %s47
    %s62 = sphi 0, %s48
    %s66 = sphi 0, %s66
    %s68 = sphi 0, %s66
    %s69 = sphi 0, %s68
    %s83 = sphi 0, %s69
    %s89 = sphi 0, %s91
    %s92 = sphi 0, %s89
    %s93 = sphi 0, %s92
    %s109 = sphi 0, %s93
    %s115 = sphi 0, %s117
    %s118 = sphi 0, %s115
    %s119 = sphi 0, %s118
    %s135 = sphi 0, %s119
  $region4: #{gat_layer_premasked.2} parent=0 // loop_header_branch
    %14 = sbr.rel (%p12) target = $region8
  $region5: #{gat_layer_premasked.2} parent=0 // loop_body
    %s16 = ssub.s32 %s11, 1
    %s17 = ssub.s32 %s11, 2
    %s18 = sadd.s32 %s11, 1
    %s19 = ssub.s32 %s11, %s18
    %p20 = scmp.eq.s32.totalorder %s19, 0
    %s22 = sadd.s32 %s21, 1
    %s23 = scalar_select %p20, %s21, %s22
    %p26 = pneg %p20
    %p27 = scmp.eq.s32.totalorder %s11, 1
    %p28 = por %p26, %p27
    %p29 = scmp.ne.s32.totalorder %s21, %s24
    %p30 = scmp.eq.s32.totalorder %s11, 0
    %p31 = por %p29, %p30
    %p32 = scmp.ne.s32.totalorder %s21, %s24
    %p33 = scmp.eq.s32.totalorder %s16, 1
    %p34 = por %p32, %p33
    %p35 = scmp.ne.s32.totalorder %s24, %s25
    %p36 = scmp.eq.s32.totalorder %s16, 0
    %p37 = por %p35, %p36
    %p38 = scmp.ne.s32.totalorder %s24, %s25
    %p39 = scmp.eq.s32.totalorder %s17, 1
    %p40 = por %p38, %p39
    %p42 = scmp.ne.s32.totalorder %s25, %s41
    %p43 = scmp.eq.s32.totalorder %s17, 0
    %p44 = por %p42, %p43
    %s46 = sadd.s32 %s45, 1
    %p49 = scmp.eq.s32.totalorder %s11, 1
    %p50 = scmp.ne.s32.totalorder %s45, %s47
    %p51 = scmp.eq.s32.totalorder %s11, 0
    %p52 = por %p50, %p51
    %p53 = scmp.ne.s32.totalorder %s45, %s47
    %p54 = scmp.eq.s32.totalorder %s16, 1
    %p55 = por %p53, %p54
    %p56 = scmp.ne.s32.totalorder %s47, %s48
    %p57 = scmp.eq.s32.totalorder %s16, 0
    %p58 = por %p56, %p57
    %p59 = scmp.ne.s32.totalorder %s47, %s48
    %p60 = scmp.eq.s32.totalorder %s17, 1
    %p61 = por %p59, %p60
    %p63 = scmp.ne.s32.totalorder %s48, %s62
    %p64 = scmp.eq.s32.totalorder %s17, 0
    %p65 = por %p63, %p64
    %s67 = sadd.s32 %s66, 1
    %p70 = scmp.eq.s32.totalorder %s11, 1
    %p71 = scmp.ne.s32.totalorder %s66, %s68
    %p72 = scmp.eq.s32.totalorder %s11, 0
    %p73 = por %p71, %p72
    %p74 = scmp.ne.s32.totalorder %s66, %s68
    %p75 = scmp.eq.s32.totalorder %s16, 1
    %p76 = por %p74, %p75
    %p77 = scmp.ne.s32.totalorder %s68, %s69
    %p78 = scmp.eq.s32.totalorder %s16, 0
    %p79 = por %p77, %p78
    %p80 = scmp.ne.s32.totalorder %s68, %s69
    %p81 = scmp.eq.s32.totalorder %s17, 1
    %p82 = por %p80, %p81
    %p84 = scmp.ne.s32.totalorder %s69, %s83
    %p85 = scmp.eq.s32.totalorder %s17, 0
    %p86 = por %p84, %p85
    %s87 = ssub.s32 %s11, %s18
    %p88 = scmp.eq.s32.totalorder %s87, 0
    %s90 = sadd.s32 %s89, 1
    %s91 = scalar_select %p88, %s89, %s90
    %p94 = pneg %p88
    %p95 = scmp.eq.s32.totalorder %s11, 1
    %p96 = por %p94, %p95
    %p97 = scmp.ne.s32.totalorder %s89, %s92
    %p98 = scmp.eq.s32.totalorder %s11, 0
    %p99 = por %p97, %p98
    %p100 = scmp.ne.s32.totalorder %s89, %s92
    %p101 = scmp.eq.s32.totalorder %s16, 1
    %p102 = por %p100, %p101
    %p103 = scmp.ne.s32.totalorder %s92, %s93
    %p104 = scmp.eq.s32.totalorder %s16, 0
    %p105 = por %p103, %p104
    %p106 = scmp.ne.s32.totalorder %s92, %s93
    %p107 = scmp.eq.s32.totalorder %s17, 1
    %p108 = por %p106, %p107
    %p110 = scmp.ne.s32.totalorder %s93, %s109
    %p111 = scmp.eq.s32.totalorder %s17, 0
    %p112 = por %p110, %p111
    %s113 = ssub.s32 %s11, %s18
    %p114 = scmp.eq.s32.totalorder %s113, 0
    %s116 = sadd.s32 %s115, 1
    %s117 = scalar_select %p114, %s115, %s116
    %p120 = pneg %p114
    %p121 = scmp.eq.s32.totalorder %s11, 1
    %p122 = por %p120, %p121
    %p123 = scmp.ne.s32.totalorder %s115, %s118
    %p124 = scmp.eq.s32.totalorder %s11, 0
    %p125 = por %p123, %p124
    %p126 = scmp.ne.s32.totalorder %s115, %s118
    %p127 = scmp.eq.s32.totalorder %s16, 1
    %p128 = por %p126, %p127
    %p129 = scmp.ne.s32.totalorder %s118, %s119
    %p130 = scmp.eq.s32.totalorder %s16, 0
    %p131 = por %p129, %p130
    %p132 = scmp.ne.s32.totalorder %s118, %s119
    %p133 = scmp.eq.s32.totalorder %s17, 1
    %p134 = por %p132, %p133
    %p136 = scmp.ne.s32.totalorder %s119, %s135
    %p137 = scmp.eq.s32.totalorder %s17, 0
    %p138 = por %p136, %p137
    %p139 = scmp.le.s32.totalorder 1, %s11
    %p140 = scmp.lt.s32.totalorder %s11, 3
    %p141 = pnand %p139, %p140
    %p142 = pneg %p141
    // Predicated region
    $region9: #{gat_layer_premasked.2} parent=5 // pred_check
      _
    $region10: #{gat_layer_premasked.2} parent=5 // pred_check_branch
      %144 = sbr.rel (%p141) target = $region12
    $region11: #{gat_layer_premasked.2} parent=5 // pred_region
      %s145 = ssub.s32 %s11, 1
      // Predicated region
      $region13: #{gat_layer_premasked.2} parent=11 // pred_check
        %p146 = pneg %p58
      $region14: #{gat_layer_premasked.2} parent=11 // pred_check_branch
        %148 = sbr.rel (%p146) target = $region16
      $region15: #{gat_layer_premasked.2} parent=11 // pred_region
        _
      $region16: #{gat_layer_premasked.2} parent=11 // pred_fallthru
        _
      // Predicated region
      $region17: #{gat_layer_premasked.2} parent=11 // pred_check
        %p149 = pneg %p79
      $region18: #{gat_layer_premasked.2} parent=11 // pred_check_branch
        %151 = sbr.rel (%p149) target = $region20
      $region19: #{gat_layer_premasked.2} parent=11 // pred_region
        _
      $region20: #{gat_layer_premasked.2} parent=11 // pred_fallthru
        _
    $region12: #{gat_layer_premasked.2} parent=5 // pred_fallthru
      _
    %p152 = scmp.lt.s32.totalorder %s11, 2
    // Predicated region
    $region21: #{gat_layer_premasked.2} parent=5 // pred_check
      %p153 = pneg %p152
    $region22: #{gat_layer_premasked.2} parent=5 // pred_check_branch
      %155 = sbr.rel (%p153) target = $region24
    $region23: #{gat_layer_premasked.2} parent=5 // pred_region
      // Predicated region
      $region25: #{gat_layer_premasked.2} parent=23 // pred_check
        %p156 = pneg %p31
      $region26: #{gat_layer_premasked.2} parent=23 // pred_check_branch
        %158 = sbr.rel (%p156) target = $region28
      $region27: #{gat_layer_premasked.2} parent=23 // pred_region
        %s159 = smul.u32 4, %s11
        %p160 = scmp.lt.s32.totalorder %s159, 7
        %s161 = scalar_select %p160, %s159, 7
        %s162 = smul.addr %s161, 8
        %s163 = scalar_lea.vmem %s0, %s162
        %s164 = smul.u32 4, %s11
      $region28: #{gat_layer_premasked.2} parent=23 // pred_fallthru
        _
    $region24: #{gat_layer_premasked.2} parent=5 // pred_fallthru
      _
    %p165 = scmp.le.s32.totalorder 1, %s11
    %p166 = scmp.lt.s32.totalorder %s11, 3
    %p167 = pnand %p165, %p166
    %p168 = pneg %p167
    // Predicated region
    $region29: #{gat_layer_premasked.2} parent=5 // pred_check
      _
    $region30: #{gat_layer_premasked.2} parent=5 // pred_check_branch
      %170 = sbr.rel (%p167) target = $region32
    $region31: #{gat_layer_premasked.2} parent=5 // pred_region
      %s171 = ssub.s32 %s11, 1
      %s172 = smul.u32 4, %s16
      %p173 = scmp.lt.s32.totalorder %s172, 7
      %s174 = scalar_select %p173, %s172, 7
      %s175 = smul.addr %s174, 8
      %s176 = scalar_lea.vmem %s0, %s175
      %p177 = pneg %p37
      %p178 = pneg %p34
      %p179 = pneg %p58
      %p180 = pneg %p55
      %p181 = pneg %p79
      %p182 = pneg %p76
      %p183 = pneg %p105
      %p184 = pneg %p102
      %s185 = smul.u32 4, %s16
      %p186 = scmp.lt.s32.totalorder %s185, 7
      %s187 = scalar_select %p186, %s185, 7
      %s188 = smul.addr %s187, 8
      %s189 = scalar_lea.vmem %s3, %s188
      %p190 = pneg %p131
      %p191 = pneg %p128
      %s192 = smul.u32 4, %s16
      %p193 = scmp.lt.s32.totalorder %s192, 7
      %s194 = scalar_select %p193, %s192, 7
      %s195 = smul.addr %s194, 8
      %s196 = scalar_lea.vmem %s4, %s195
      %s197 = smul.u32 4, %s16
      %p198 = scmp.lt.s32.totalorder %s197, 7
      %s199 = scalar_select %p198, %s197, 7
      %s200 = smul.addr %s199, 8
      %s201 = scalar_lea.vmem %s0, %s200
      %s202 = smul.u32 4, %s16
      %s203 = smul.u32 4, %s16
      %p204 = scmp.lt.s32.totalorder %s203, 7
      %s205 = scalar_select %p204, %s203, 7
      %s206 = smul.addr %s205, 8
      %s207 = scalar_lea.vmem %s3, %s206
      %s208 = smul.u32 4, %s16
      %s209 = smul.u32 4, %s16
      %p210 = scmp.lt.s32.totalorder %s209, 7
      %s211 = scalar_select %p210, %s209, 7
      %s212 = smul.addr %s211, 8
      %s213 = scalar_lea.vmem %s4, %s212
      %s214 = smul.u32 4, %s16
      %v215 = vld [vmem:[%s201] sm:$0xff]
      %v216 = vld [vmem:[%s201 + $0x8] sm:$0xff]
      %v217 = vld [vmem:[%s201 + $0x10] sm:$0xff]
      %v218 = vld [vmem:[%s201 + $0x18] sm:$0xff]
      %v219 = vld [vmem:[%s1] sm:$0xff]
      %v220 = vld [vmem:[%s1 + $0x8] sm:$0xff]
      %v221 = vld [vmem:[%s1 + $0x10] sm:$0xff]
      %v222 = vld [vmem:[%s1 + $0x18] sm:$0xff]
      %vm223 = vcmask 261120
      %v225 = vsel %vm223, %v215, 0
      %v228 = vsel %vm223, %v216, 0
      %v231 = vsel %vm223, %v217, 0
      %v234 = vsel %vm223, %v218, 0
      %236 = vmatprep.subr.mxu0 0.0
      %237 = vmatpush1.msra.mxu0 0.0
      %238 = vmatprep.subr.mxu0 0.0
      %239 = vmatpush1.msra.mxu0 0.0
      %240 = vmatprep.subr.mxu0 0.0
      %241 = vmatpush1.msra.mxu0 0.0
      %242 = vmatprep.subr.mxu0 0.0
      %243 = vmatpush1.msra.mxu0 0.0
      %244 = vmatprep.subr.mxu0 0.0
      %245 = vmatpush1.msra.mxu0 0.0
      %246 = vmatprep.subr.mxu0 0.0
      %247 = vmatpush1.msra.mxu0 0.0
      %248 = vmatprep.subr.mxu0 0.0
      %249 = vmatpush1.msra.mxu0 0.0
      %250 = vmatprep.subr.mxu0 0.0
      %251 = vmatpush1.msra.mxu0 0.0
      %252 = vmatprep.subr.mxu0 0.0
      %253 = vmatpush1.msra.mxu0 0.0
      %254 = vmatprep.subr.mxu0 0.0
      %255 = vmatpush1.msra.mxu0 0.0
      %256 = vmatprep.subr.mxu0 0.0
      %257 = vmatpush1.msra.mxu0 0.0
      %258 = vmatprep.subr.mxu0 0.0
      %259 = vmatpush1.msra.mxu0 0.0
      %260 = vmatprep.subr.mxu0 0.0
      %261 = vmatpush1.msra.mxu0 %v222
      %262 = vmatprep.subr.mxu0 0.0
      %263 = vmatpush1.msra.mxu0 %v221
      %264 = vmatprep.subr.mxu0 0.0
      %265 = vmatpush1.msra.mxu0 %v220
      %266 = vmatprep.subr.mxu0 0.0
      %267 = vmatpush1.msra.mxu0 %v219
      %268 = vmatprep.subr.mxu0 0.0
      %269 = vmatpush2.msra.mxu0 0.0
      %270 = vmatprep.subr.mxu0 0.0
      %271 = vmatpush2.msra.mxu0 0.0
      %272 = vmatprep.subr.mxu0 0.0
      %273 = vmatpush2.msra.mxu0 0.0
      %274 = vmatprep.subr.mxu0 0.0
      %275 = vmatpush2.msra.mxu0 0.0
      %276 = vmatprep.subr.mxu0 0.0
      %277 = vmatpush2.msra.mxu0 0.0
      %278 = vmatprep.subr.mxu0 0.0
      %279 = vmatpush2.msra.mxu0 0.0
      %280 = vmatprep.subr.mxu0 0.0
      %281 = vmatpush2.msra.mxu0 0.0
      %282 = vmatprep.subr.mxu0 0.0
      %283 = vmatpush2.msra.mxu0 0.0
      %284 = vmatprep.subr.mxu0 0.0
      %285 = vmatpush2.msra.mxu0 0.0
      %286 = vmatprep.subr.mxu0 0.0
      %287 = vmatpush2.msra.mxu0 0.0
      %288 = vmatprep.subr.mxu0 0.0
      %289 = vmatpush2.msra.mxu0 0.0
      %290 = vmatprep.subr.mxu0 0.0
      %291 = vmatpush2.msra.mxu0 0.0
      %292 = vmatprep.subr.mxu0 0.0
      %293 = vmatpush2.msra.mxu0 0.0
      %294 = vmatprep.subr.mxu0 0.0
      %295 = vmatpush2.msra.mxu0 0.0
      %296 = vmatprep.subr.mxu0 0.0
      %297 = vmatpush2.msra.mxu0 0.0
      %298 = vmatprep.subr.mxu0 0.0
      %299 = vmatpush2.msra.mxu0 0.0
      %300 = vmatprep.mubr.f32.mxu0 0.0
      %301 = vmatmul.mubr.f32.gmra.mxu0 %v225
      %v302 = vpop.f32.mrf.mxu0
      %v303 = vadd.f32 0.0, %v302
      %v304 = vpop.f32.mrf.mxu0
      %305 = vmatprep.mubr.f32.mxu0 0.0
      %306 = vmatmul.mubr.f32.gmra.mxu0 %v228
      %v307 = vpop.f32.mrf.mxu0
      %v308 = vadd.f32 0.0, %v307
      %v309 = vpop.f32.mrf.mxu0
      %310 = vmatprep.mubr.f32.mxu0 0.0
      %311 = vmatmul.mubr.f32.gmra.mxu0 %v231
      %v312 = vpop.f32.mrf.mxu0
      %v313 = vadd.f32 0.0, %v312
      %v314 = vpop.f32.mrf.mxu0
      %315 = vmatprep.mubr.f32.mxu0 0.0
      %316 = vmatmul.mubr.f32.gmra.mxu0 %v234
      %v317 = vpop.f32.mrf.mxu0
      %v318 = vadd.f32 0.0, %v317
      %v319 = vpop.f32.mrf.mxu0
      %320 = vdwg.mxu0
      %vm321 = vcmask 130048
      %322 = vst.msk [vmem:[%s207] sm:$0xff] %vm321, %v303
      %323 = vst.msk [vmem:[%s207 + $0x8] sm:$0xff] %vm321, %v308
      %324 = vst.msk [vmem:[%s207 + $0x10] sm:$0xff] %vm321, %v313
      %325 = vst.msk [vmem:[%s207 + $0x18] sm:$0xff] %vm321, %v318
      %vm326 = vcmask 138368
      %327 = vst.msk [vmem:[%s207] sm:$0xff] %vm326, 1.0
      %328 = vst.msk [vmem:[%s207 + $0x8] sm:$0xff] %vm326, 1.0
      %329 = vst.msk [vmem:[%s207 + $0x10] sm:$0xff] %vm326, 1.0
      %330 = vst.msk [vmem:[%s207 + $0x18] sm:$0xff] %vm326, 1.0
      %v331 = vld [vmem:[%s2] sm:$0xff]
      %v332 = vld [vmem:[%s2 + $0x8] sm:$0xff]
      %v334 = vsel %vm321, %v303, 0
      %v337 = vsel %vm321, %v308, 0
      %v340 = vsel %vm321, %v313, 0
      %v343 = vsel %vm321, %v318, 0
      %345 = vmatprep.subr.mxu0 0.0
      %346 = vmatpush1.msra.mxu0 0.0
      %347 = vmatprep.subr.mxu0 0.0
      %348 = vmatpush1.msra.mxu0 0.0
      %349 = vmatprep.subr.mxu0 0.0
      %350 = vmatpush1.msra.mxu0 0.0
      %351 = vmatprep.subr.mxu0 0.0
      %352 = vmatpush1.msra.mxu0 0.0
      %353 = vmatprep.subr.mxu0 0.0
      %354 = vmatpush1.msra.mxu0 0.0
      %355 = vmatprep.subr.mxu0 0.0
      %356 = vmatpush1.msra.mxu0 0.0
      %357 = vmatprep.subr.mxu0 0.0
      %358 = vmatpush1.msra.mxu0 0.0
      %359 = vmatprep.subr.mxu0 0.0
      %360 = vmatpush1.msra.mxu0 0.0
      %361 = vmatprep.subr.mxu0 0.0
      %362 = vmatpush1.msra.mxu0 0.0
      %363 = vmatprep.subr.mxu0 0.0
      %364 = vmatpush1.msra.mxu0 0.0
      %365 = vmatprep.subr.mxu0 0.0
      %366 = vmatpush1.msra.mxu0 0.0
      %367 = vmatprep.subr.mxu0 0.0
      %368 = vmatpush1.msra.mxu0 0.0
      %369 = vmatprep.subr.mxu0 0.0
      %370 = vmatpush1.msra.mxu0 0.0
      %371 = vmatprep.subr.mxu0 0.0
      %372 = vmatpush1.msra.mxu0 0.0
      %373 = vmatprep.subr.mxu0 0.0
      %374 = vmatpush1.msra.mxu0 %v332
      %375 = vmatprep.subr.mxu0 0.0
      %376 = vmatpush1.msra.mxu0 %v331
      %377 = vmatprep.subr.mxu0 0.0
      %378 = vmatpush2.msra.mxu0 0.0
      %379 = vmatprep.subr.mxu0 0.0
      %380 = vmatpush2.msra.mxu0 0.0
      %381 = vmatprep.subr.mxu0 0.0
      %382 = vmatpush2.msra.mxu0 0.0
      %383 = vmatprep.subr.mxu0 0.0
      %384 = vmatpush2.msra.mxu0 0.0
      %385 = vmatprep.subr.mxu0 0.0
      %386 = vmatpush2.msra.mxu0 0.0
      %387 = vmatprep.subr.mxu0 0.0
      %388 = vmatpush2.msra.mxu0 0.0
      %389 = vmatprep.subr.mxu0 0.0
      %390 = vmatpush2.msra.mxu0 0.0
      %391 = vmatprep.subr.mxu0 0.0
      %392 = vmatpush2.msra.mxu0 0.0
      %393 = vmatprep.subr.mxu0 0.0
      %394 = vmatpush2.msra.mxu0 0.0
      %395 = vmatprep.subr.mxu0 0.0
      %396 = vmatpush2.msra.mxu0 0.0
      %397 = vmatprep.subr.mxu0 0.0
      %398 = vmatpush2.msra.mxu0 0.0
      %399 = vmatprep.subr.mxu0 0.0
      %400 = vmatpush2.msra.mxu0 0.0
      %401 = vmatprep.subr.mxu0 0.0
      %402 = vmatpush2.msra.mxu0 0.0
      %403 = vmatprep.subr.mxu0 0.0
      %404 = vmatpush2.msra.mxu0 0.0
      %405 = vmatprep.subr.mxu0 0.0
      %406 = vmatpush2.msra.mxu0 0.0
      %407 = vmatprep.subr.mxu0 0.0
      %408 = vmatpush2.msra.mxu0 0.0
      %409 = vmatprep.mubr.f32.mxu0 0.0
      %410 = vmatmul.mubr.f32.gmra.mxu0 %v334
      %v411 = vpop.f32.mrf.mxu0
      %v412 = vadd.f32 0.0, %v411
      %v413 = vpop.f32.mrf.mxu0
      %414 = vmatprep.mubr.f32.mxu0 0.0
      %415 = vmatmul.mubr.f32.gmra.mxu0 %v337
      %v416 = vpop.f32.mrf.mxu0
      %v417 = vadd.f32 0.0, %v416
      %v418 = vpop.f32.mrf.mxu0
      %419 = vmatprep.mubr.f32.mxu0 0.0
      %420 = vmatmul.mubr.f32.gmra.mxu0 %v340
      %v421 = vpop.f32.mrf.mxu0
      %v422 = vadd.f32 0.0, %v421
      %v423 = vpop.f32.mrf.mxu0
      %424 = vmatprep.mubr.f32.mxu0 0.0
      %425 = vmatmul.mubr.f32.gmra.mxu0 %v343
      %v426 = vpop.f32.mrf.mxu0
      %v427 = vadd.f32 0.0, %v426
      %v428 = vpop.f32.mrf.mxu0
      %429 = vdwg.mxu0
      %vm430 = vcmask 7168
      %431 = vst.msk [vmem:[%s213] sm:$0xff] %vm430, %v412
      %432 = vst.msk [vmem:[%s213 + $0x8] sm:$0xff] %vm430, %v417
      %433 = vst.msk [vmem:[%s213 + $0x10] sm:$0xff] %vm430, %v422
      %434 = vst.msk [vmem:[%s213 + $0x18] sm:$0xff] %vm430, %v427
      %s435 = smul.u32 4, %s16
      %p436 = scmp.lt.s32.totalorder %s435, 7
      %s437 = scalar_select %p436, %s435, 7
      %s438 = smul.addr %s437, 8
      %s439 = scalar_lea.vmem %s3, %s438
      %s440 = smul.u32 4, %s16
      %p441 = scmp.lt.s32.totalorder %s440, 7
      %s442 = scalar_select %p441, %s440, 7
      %s443 = smul.addr %s442, 8
      %s444 = scalar_lea.vmem %s4, %s443
      // Predicated region
      $region33: #{gat_layer_premasked.2} parent=31 // pred_check
        %p445 = pneg %p102
      $region34: #{gat_layer_premasked.2} parent=31 // pred_check_branch
        %447 = sbr.rel (%p445) target = $region36
      $region35: #{gat_layer_premasked.2} parent=31 // pred_region
        %s448 = smul.u32 4, %s16
      $region36: #{gat_layer_premasked.2} parent=31 // pred_fallthru
        _
      // Predicated region
      $region37: #{gat_layer_premasked.2} parent=31 // pred_check
        %p449 = pneg %p128
      $region38: #{gat_layer_premasked.2} parent=31 // pred_check_branch
        %451 = sbr.rel (%p449) target = $region40
      $region39: #{gat_layer_premasked.2} parent=31 // pred_region
        %s452 = smul.u32 4, %s16
      $region40: #{gat_layer_premasked.2} parent=31 // pred_fallthru
        _
    $region32: #{gat_layer_premasked.2} parent=5 // pred_fallthru
      _
    %p453 = scmp.le.s32.totalorder 2, %s11
    // Predicated region
    $region41: #{gat_layer_premasked.2} parent=5 // pred_check
      %p454 = pneg %p453
    $region42: #{gat_layer_premasked.2} parent=5 // pred_check_branch
      %456 = sbr.rel (%p454) target = $region44
    $region43: #{gat_layer_premasked.2} parent=5 // pred_region
      %s457 = ssub.s32 %s11, 2
      // Predicated region
      $region45: #{gat_layer_premasked.2} parent=43 // pred_check
        %p458 = pneg %p108
      $region46: #{gat_layer_premasked.2} parent=43 // pred_check_branch
        %460 = sbr.rel (%p458) target = $region48
      $region47: #{gat_layer_premasked.2} parent=43 // pred_region
        %s461 = smul.u32 4, %s17
        %p462 = scmp.lt.s32.totalorder %s461, 7
        %s463 = scalar_select %p462, %s461, 7
        %s464 = smul.addr %s463, 8
        %s465 = scalar_lea.vmem %s3, %s464
      $region48: #{gat_layer_premasked.2} parent=43 // pred_fallthru
        _
      // Predicated region
      $region49: #{gat_layer_premasked.2} parent=43 // pred_check
        %p466 = pneg %p134
      $region50: #{gat_layer_premasked.2} parent=43 // pred_check_branch
        %468 = sbr.rel (%p466) target = $region52
      $region51: #{gat_layer_premasked.2} parent=43 // pred_region
        %s469 = smul.u32 4, %s17
        %p470 = scmp.lt.s32.totalorder %s469, 7
        %s471 = scalar_select %p470, %s469, 7
        %s472 = smul.addr %s471, 8
        %s473 = scalar_lea.vmem %s4, %s472
      $region52: #{gat_layer_premasked.2} parent=43 // pred_fallthru
        _
    $region44: #{gat_layer_premasked.2} parent=5 // pred_fallthru
      _
  $region6: #{gat_layer_premasked.2} parent=0 // loop_footer
    %s15 = sadd.s32 1, %s11
  $region7: #{gat_layer_premasked.2} parent=0 // loop_footer_branch
    %10 = sbr.rel target = $region3
  $region8: #{gat_layer_premasked.2} parent=0 // loop_exit
    _

</llo_original>
